<compile_context>
chip_gen: v5e
topology: v5e:2x2
jax: 0.10.0
libtpu: 0.0.40
codegen_flags: <defaults>
</compile_context>

<pallas_src>
import functools

import jax
import jax.numpy as jnp
from jax import lax
from jax.experimental import pallas as pl
from jax.experimental.pallas import tpu as pltpu

K = 7
PAD = K // 2
RATIO = 16


def cbam_kernel(x_ref, w1_ref, w2_ref, wsa_ref, o_ref, sum_acc, max_acc, *, inv_hw):
    """Fused CBAM_Block forward for one (batch block, HW tile) grid step.

    x_ref  : VMEM (bb, C, thw)  input tile, spatial collapsed -> lane-dense
    w1_ref : VMEM (C, Crp)      ca.fc[0] weight, transposed + zero-padded hidden dim
    w2_ref : VMEM (Crp, C)      ca.fc[2] weight, transposed + zero-padded hidden dim
    wsa_ref: SMEM (2,)          sa.conv1 centre taps [avg-tap, max-tap]
    o_ref  : VMEM (bb, 1, 1)    sa(ca(x)) for this batch block
    sum_acc, max_acc : VMEM (bb, C) f32 running sum / max over the HW tiles
    """
    hw_idx = pl.program_id(1)

    @pl.when(hw_idx == 0)
    def _():
        sum_acc[...] = jnp.zeros_like(sum_acc)
        max_acc[...] = jnp.full_like(max_acc, -jnp.inf)

    x = x_ref[...]                                              # native dtype, read once
    sum_acc[...] += jnp.sum(x, axis=-1, dtype=jnp.float32)      # f32 accumulation
    max_acc[...] = jnp.maximum(max_acc[...],
                               jnp.max(x, axis=-1).astype(jnp.float32))

    @pl.when(hw_idx == pl.num_programs(1) - 1)
    def _():
        # ---- ChannelAttention: global avg / max pooling results -------------
        s = sum_acc[...] * inv_hw            # (bb, C) mean, f32
        m = max_acc[...]                     # (bb, C) max,  f32

        # Shared MLP on the MXU: sigmoid(W2 @ (relu(W1 s) + relu(W1 m))).
        # Padded hidden columns of W1 give relu(0)=0 and the matching zero rows
        # of W2 contribute nothing, so the padding is exact.
        w1 = w1_ref[...]                     # (C, Crp)
        w2 = w2_ref[...]                     # (Crp, C)
        h = (jnp.maximum(jnp.dot(s, w1, preferred_element_type=jnp.float32), 0.0)
             + jnp.maximum(jnp.dot(m, w1, preferred_element_type=jnp.float32), 0.0))
        ca = jax.nn.sigmoid(jnp.dot(h, w2, preferred_element_type=jnp.float32))  # (bb, C)

        # ---- SpatialAttention on ca (spatially a (bb, C, 1, 1) map) ----------
        a = jnp.mean(ca, axis=-1, keepdims=True)     # (bb, 1) channel mean
        mx = jnp.max(ca, axis=-1, keepdims=True)     # (bb, 1) channel max
        # 7x7 conv, padding=3, on a zero-padded 1x1 map: only the centre tap
        # (3,3) sees non-zero input -> w[0,0,3,3]*mean + w[0,1,3,3]*max exactly.
        y = wsa_ref[0] * a + wsa_ref[1] * mx
        o_ref[...] = jax.nn.sigmoid(y)[:, :, None]   # (bb, 1, 1)


def _vmem_capacity_bytes():
    """Generation-aware VMEM capacity (falls back to v7x-conservative 64 MiB)."""
    try:
        return int(pltpu.get_tpu_info().vmem_capacity_bytes)
    except Exception:
        return 64 * 1024 * 1024


def _largest_divisor_leq(n, cap):
    cap = max(1, min(n, cap))
    for d in range(cap, 0, -1):
        if n % d == 0:
            return d
    return 1


@jax.jit
def cbam_block(x, w1, w2, w_sa):
    """CBAM_Block.forward.

    x   : (B, C, H, W)       any float dtype (bf16 recommended: halves HBM read)
    w1  : (C//16, C, 1, 1)   ca.fc[0] weight (Conv2d(C, C//16, 1, bias=False))
    w2  : (C, C//16, 1, 1)   ca.fc[2] weight (Conv2d(C//16, C, 1, bias=False))
    w_sa: (1, 2, 7, 7)       sa.conv1 weight (Conv2d(2, 1, 7, padding=3, bias=False))
    returns sa(ca(x)): (B, 1, 1, 1) float32
    """
    B, C, H, W = x.shape
    Cr = w1.shape[0]
    HW = H * W
    itemsize = jnp.dtype(x.dtype).itemsize

    # ---- generation-aware VMEM budgets -------------------------------------
    vmem_cap = _vmem_capacity_bytes()
    if vmem_cap >= 100 * 1024 * 1024:            # v5e / v6e: 128 MiB VMEM
        block_budget = 24 * 1024 * 1024
        vmem_limit = 96 * 1024 * 1024
    else:                                         # v7x: 64 MiB VMEM per TC
        block_budget = 10 * 1024 * 1024
        vmem_limit = 48 * 1024 * 1024

    # ---- host-side weight prep (tiny; x itself is untouched) ----------------
    x3 = x.reshape(B, C, HW)                      # metadata-only collapse, native dtype
    Crp = max(128, ((Cr + 127) // 128) * 128)     # pad hidden dim to a full lane tile
    w1_t = jnp.zeros((C, Crp), jnp.float32).at[:, :Cr].set(
        w1.reshape(Cr, C).T.astype(jnp.float32))
    w2_t = jnp.zeros((Crp, C), jnp.float32).at[:Cr, :].set(
        w2.reshape(C, Cr).T.astype(jnp.float32))
    wsa_c = w_sa[0, :, PAD, PAD].astype(jnp.float32)   # (2,) centre taps [avg, max]

    # ---- tiling --------------------------------------------------------------
    per_batch_bytes = C * HW * itemsize
    if per_batch_bytes <= block_budget:
        thw = HW
        max_bb = max(1, block_budget // per_batch_bytes)
    elif HW % 128 == 0:
        # One batch doesn't fit: tile the lane (HW) axis in 128-multiples and
        # reduce across a trailing 'arbitrary' grid axis.
        max_bb = 1
        n_chunks = HW // 128
        chunk_bytes = C * 128 * itemsize
        chunks = _largest_divisor_leq(n_chunks, max(1, block_budget // chunk_bytes))
        thw = chunks * 128
    else:
        # TODO(synk): add a C-tile reduction axis for huge non-128-divisible HW.
        max_bb = 1
        thw = HW

    # Guarantee >= 2 batch grid steps so the 'parallel' axis can shard across
    # v7x's two TensorCores and the DMA pipeline has something to overlap.
    if B >= 2:
        max_bb = min(max_bb, B // 2)
    bb = _largest_divisor_leq(B, max_bb)
    # TODO(synk): for prime/awkward B, pad B on the host instead of bb=1 tiny steps.

    n_hw = HW // thw
    grid = (B // bb, n_hw)

    kernel = functools.partial(cbam_kernel, inv_hw=1.0 / float(HW))

    out = pl.pallas_call(
        kernel,
        out_shape=jax.ShapeDtypeStruct((B, 1, 1), jnp.float32),
        grid=grid,
        in_specs=[
            pl.BlockSpec((bb, C, thw), lambda b, h: (b, 0, h)),      # x tile
            pl.BlockSpec((C, Crp), lambda b, h: (0, 0)),             # fc weight 1
            pl.BlockSpec((Crp, C), lambda b, h: (0, 0)),             # fc weight 2
            pl.BlockSpec(memory_space=pltpu.MemorySpace.SMEM),       # spatial-conv centre taps
        ],
        out_specs=pl.BlockSpec((bb, 1, 1), lambda b, h: (b, 0, 0)),
        scratch_shapes=[
            pltpu.VMEM((bb, C), jnp.float32),    # running sum over HW tiles
            pltpu.VMEM((bb, C), jnp.float32),    # running max over HW tiles
        ],
        compiler_params=pltpu.CompilerParams(
            dimension_semantics=("parallel", "arbitrary"),
            vmem_limit_bytes=vmem_limit,
        ),
    )(x3, w1_t, w2_t, wsa_c)

    return out.reshape(B, 1, 1, 1)


def reference(x, w1, w2, w_sa):
    """Pure-JAX mirror of the PyTorch CBAM_Block forward."""
    dn = ("NCHW", "OIHW", "NCHW")
    avg = jnp.mean(x, axis=(2, 3), keepdims=True)                    # AdaptiveAvgPool2d(1)
    mx = jnp.max(x, axis=(2, 3), keepdims=True)                      # AdaptiveMaxPool2d(1)

    def fc(v):
        h = lax.conv_general_dilated(v, w1, (1, 1), "VALID", dimension_numbers=dn)
        h = jnp.maximum(h, 0.0)
        return lax.conv_general_dilated(h, w2, (1, 1), "VALID", dimension_numbers=dn)

    ca = jax.nn.sigmoid(fc(avg) + fc(mx))                            # (B, C, 1, 1)

    a = jnp.mean(ca, axis=1, keepdims=True)
    m = jnp.max(ca, axis=1, keepdims=True)
    cat = jnp.concatenate([a, m], axis=1)                            # (B, 2, 1, 1)
    y = lax.conv_general_dilated(cat, w_sa, (1, 1),
                                 ((PAD, PAD), (PAD, PAD)),
                                 dimension_numbers=dn)
    return jax.nn.sigmoid(y)                                         # (B, 1, 1, 1)


if __name__ == "__main__":
    key = jax.random.PRNGKey(0)
    kx, k1, k2, k3 = jax.random.split(key, 4)

    # ChannelAttention uses C//16 hidden channels, so C must be >= 16.
    B, C, H, W = 2, 32, 16, 16
    Cr = C // RATIO

    x = jax.random.normal(kx, (B, C, H, W), dtype=jnp.float32)

    def conv_init(k, shape):
        fan_in = shape[1] * shape[2] * shape[3]
        bound = 1.0 / jnp.sqrt(fan_in)
        return jax.random.uniform(k, shape, jnp.float32, -bound, bound)

    w1 = conv_init(k1, (Cr, C, 1, 1))      # ca.fc[0]
    w2 = conv_init(k2, (C, Cr, 1, 1))      # ca.fc[2]
    w_sa = conv_init(k3, (1, 2, K, K))     # sa.conv1

    # f32 path, tight tolerance
    out = jax.block_until_ready(cbam_block(x, w1, w2, w_sa))
    ref = reference(x, w1, w2, w_sa)
    assert out.shape == (B, 1, 1, 1)
    assert jnp.allclose(out, ref, atol=1e-5, rtol=1e-5), "f32 mismatch vs reference"

    # bf16 activations flow through the kernel natively (halves the HBM read);
    # compare against the f32 reference with a bf16-appropriate tolerance.
    x_bf16 = x.astype(jnp.bfloat16)
    out_bf16 = jax.block_until_ready(cbam_block(x_bf16, w1, w2, w_sa))
    ref_bf16 = reference(x_bf16.astype(jnp.float32), w1, w2, w_sa)
    assert jnp.allclose(out_bf16, ref_bf16, atol=5e-2, rtol=5e-2), "bf16 mismatch vs reference"

    print("KERNEL_OK")
</pallas_src>

<mosaic_0001>
module attributes {stable_mosaic.version = 11 : i64} {
  func.func @cbam_kernel(%arg0: i32, %arg1: i32, %arg2: memref<1x32x256xf32, #tpu.memory_space<vmem>>, %arg3: memref<32x128xf32, #tpu.memory_space<vmem>>, %arg4: memref<128x32xf32, #tpu.memory_space<vmem>>, %arg5: memref<2xf32, #tpu.memory_space<smem>>, %arg6: memref<1x1x1xf32, #tpu.memory_space<vmem>>, %arg7: memref<1x32xf32, #tpu.memory_space<vmem>>, %arg8: memref<1x32xf32, #tpu.memory_space<vmem>>) attributes {dimension_semantics = [#tpu.dimension_semantics<parallel>, #tpu.dimension_semantics<arbitrary>], iteration_bounds = array<i64: 2, 1>, scalar_prefetch = 0 : i64, scratch_operands = 2 : i64, tpu.core_type = #tpu.core_type<tc>, window_params = [{transform_indices = @transform_0, window_bounds = array<i64: 1, 32, 256>}, {pipeline_mode = #tpu.pipeline_mode<synchronous>, transform_indices = @transform_1, window_bounds = array<i64: 32, 128>}, {pipeline_mode = #tpu.pipeline_mode<synchronous>, transform_indices = @transform_2, window_bounds = array<i64: 128, 32>}, {transform_indices = @transform_3, window_bounds = array<i64: 2>}, {transform_indices = @transform_4, window_bounds = array<i64: 1, 1, 1>}]} {
    %c0_i32 = arith.constant 0 : i32
    %0 = arith.cmpi eq, %arg1, %c0_i32 : i32
    %1 = arith.extui %0 : i1 to i32
    %c0_i32_0 = arith.constant 0 : i32
    %2 = arith.cmpi ne, %1, %c0_i32_0 : i32
    scf.if %2 {
      %cst_14 = arith.constant 0.000000e+00 : f32
      %15 = vector.broadcast %cst_14 : f32 to vector<1x32xf32>
      %c0_15 = arith.constant 0 : index
      %c0_16 = arith.constant 0 : index
      %16 = vector.load %arg7[%c0_15, %c0_16] : memref<1x32xf32, #tpu.memory_space<vmem>>, vector<1x32xf32>
      tpu.vector_store %arg7[%c0_15, %c0_16], %15 {strides = array<i32>} : memref<1x32xf32, #tpu.memory_space<vmem>>, vector<1x32xf32>,
      %cst_17 = arith.constant 0xFF800000 : f32
      %17 = vector.broadcast %cst_17 : f32 to vector<1x32xf32>
      %c0_18 = arith.constant 0 : index
      %c0_19 = arith.constant 0 : index
      %18 = vector.load %arg8[%c0_18, %c0_19] : memref<1x32xf32, #tpu.memory_space<vmem>>, vector<1x32xf32>
      tpu.vector_store %arg8[%c0_18, %c0_19], %17 {strides = array<i32>} : memref<1x32xf32, #tpu.memory_space<vmem>>, vector<1x32xf32>,
    } else {
    }
    %c0 = arith.constant 0 : index
    %c0_1 = arith.constant 0 : index
    %c0_2 = arith.constant 0 : index
    %3 = vector.load %arg2[%c0, %c0_1, %c0_2] : memref<1x32x256xf32, #tpu.memory_space<vmem>>, vector<1x32x256xf32>
    %c0_3 = arith.constant 0 : index
    %c0_4 = arith.constant 0 : index
    %4 = vector.load %arg7[%c0_3, %c0_4] : memref<1x32xf32, #tpu.memory_space<vmem>>, vector<1x32xf32>
    %cst = arith.constant dense<0.000000e+00> : vector<1x32xf32>
    %5 = vector.multi_reduction <add>, %3, %cst [2] : vector<1x32x256xf32> to vector<1x32xf32>
    %6 = arith.addf %4, %5 : vector<1x32xf32>
    %c0_5 = arith.constant 0 : index
    %c0_6 = arith.constant 0 : index
    %7 = vector.load %arg7[%c0_5, %c0_6] : memref<1x32xf32, #tpu.memory_space<vmem>>, vector<1x32xf32>
    tpu.vector_store %arg7[%c0_5, %c0_6], %6 {strides = array<i32>} : memref<1x32xf32, #tpu.memory_space<vmem>>, vector<1x32xf32>,
    %c0_7 = arith.constant 0 : index
    %c0_8 = arith.constant 0 : index
    %8 = vector.load %arg8[%c0_7, %c0_8] : memref<1x32xf32, #tpu.memory_space<vmem>>, vector<1x32xf32>
    %cst_9 = arith.constant dense<0xFF800000> : vector<1x32xf32>
    %9 = vector.multi_reduction <maximumf>, %3, %cst_9 [2] : vector<1x32x256xf32> to vector<1x32xf32>
    %10 = arith.maximumf %8, %9 : vector<1x32xf32>
    %c0_10 = arith.constant 0 : index
    %c0_11 = arith.constant 0 : index
    %11 = vector.load %arg8[%c0_10, %c0_11] : memref<1x32xf32, #tpu.memory_space<vmem>>, vector<1x32xf32>
    tpu.vector_store %arg8[%c0_10, %c0_11], %10 {strides = array<i32>} : memref<1x32xf32, #tpu.memory_space<vmem>>, vector<1x32xf32>,
    %c0_i32_12 = arith.constant 0 : i32
    %12 = arith.cmpi eq, %arg1, %c0_i32_12 : i32
    %13 = arith.extui %12 : i1 to i32
    %c0_i32_13 = arith.constant 0 : i32
    %14 = arith.cmpi ne, %13, %c0_i32_13 : i32
    scf.if %14 {
      %c0_14 = arith.constant 0 : index
      %c0_15 = arith.constant 0 : index
      %15 = vector.load %arg7[%c0_14, %c0_15] : memref<1x32xf32, #tpu.memory_space<vmem>>, vector<1x32xf32>
      %cst_16 = arith.constant 3.906250e-03 : f32
      %16 = vector.broadcast %cst_16 : f32 to vector<1x32xf32>
      %17 = arith.mulf %15, %16 : vector<1x32xf32>
      %c0_17 = arith.constant 0 : index
      %c0_18 = arith.constant 0 : index
      %18 = vector.load %arg8[%c0_17, %c0_18] : memref<1x32xf32, #tpu.memory_space<vmem>>, vector<1x32xf32>
      %c0_19 = arith.constant 0 : index
      %c0_20 = arith.constant 0 : index
      %19 = vector.load %arg3[%c0_19, %c0_20] : memref<32x128xf32, #tpu.memory_space<vmem>>, vector<32x128xf32>
      %c0_21 = arith.constant 0 : index
      %c0_22 = arith.constant 0 : index
      %20 = vector.load %arg4[%c0_21, %c0_22] : memref<128x32xf32, #tpu.memory_space<vmem>>, vector<128x32xf32>
      %cst_23 = arith.constant dense<0.000000e+00> : vector<1x128xf32>
      %21 = tpu.matmul %17, %19, %cst_23 {dimension_numbers = #tpu.dot_dimension_numbers<[1], [0], [0], [1], [0, 0, 1, 1], [], []>} : vector<1x32xf32>, vector<32x128xf32>, vector<1x128xf32> -> vector<1x128xf32>
      %cst_24 = arith.constant 0.000000e+00 : f32
      %22 = vector.broadcast %cst_24 : f32 to vector<1x128xf32>
      %23 = arith.maximumf %21, %22 : vector<1x128xf32>
      %cst_25 = arith.constant dense<0.000000e+00> : vector<1x128xf32>
      %24 = tpu.matmul %18, %19, %cst_25 {dimension_numbers = #tpu.dot_dimension_numbers<[1], [0], [0], [1], [0, 0, 1, 1], [], []>} : vector<1x32xf32>, vector<32x128xf32>, vector<1x128xf32> -> vector<1x128xf32>
      %cst_26 = arith.constant 0.000000e+00 : f32
      %25 = vector.broadcast %cst_26 : f32 to vector<1x128xf32>
      %26 = arith.maximumf %24, %25 : vector<1x128xf32>
      %27 = arith.addf %23, %26 : vector<1x128xf32>
      %cst_27 = arith.constant dense<0.000000e+00> : vector<1x32xf32>
      %28 = tpu.matmul %27, %20, %cst_27 {dimension_numbers = #tpu.dot_dimension_numbers<[1], [0], [0], [1], [0, 0, 1, 1], [], []>} : vector<1x128xf32>, vector<128x32xf32>, vector<1x32xf32> -> vector<1x32xf32>
      %29 = arith.negf %28 : vector<1x32xf32>
      %30 = math.exp %29 : vector<1x32xf32>
      %cst_28 = arith.constant 1.000000e+00 : f32
      %31 = vector.broadcast %cst_28 : f32 to vector<1x32xf32>
      %32 = arith.addf %31, %30 : vector<1x32xf32>
      %33 = arith.divf %31, %32 : vector<1x32xf32>
      %cst_29 = arith.constant dense<0.000000e+00> : vector<1xf32>
      %34 = vector.multi_reduction <add>, %33, %cst_29 [1] : vector<1x32xf32> to vector<1xf32>
      %35 = vector.shape_cast %34 : vector<1xf32> to vector<1x1xf32>
      %cst_30 = arith.constant 3.200000e+01 : f32
      %36 = vector.broadcast %cst_30 : f32 to vector<1x1xf32>
      %37 = arith.divf %35, %36 : vector<1x1xf32>
      %cst_31 = arith.constant dense<0xFF800000> : vector<1xf32>
      %38 = vector.multi_reduction <maximumf>, %33, %cst_31 [1] : vector<1x32xf32> to vector<1xf32>
      %39 = vector.shape_cast %38 : vector<1xf32> to vector<1x1xf32>
      %c0_32 = arith.constant 0 : index
      %40 = memref.load %arg5[%c0_32] : memref<2xf32, #tpu.memory_space<smem>>
      %41 = vector.broadcast %40 : f32 to vector<1x1xf32>
      %42 = arith.mulf %41, %37 : vector<1x1xf32>
      %c1 = arith.constant 1 : index
      %43 = memref.load %arg5[%c1] : memref<2xf32, #tpu.memory_space<smem>>
      %44 = vector.broadcast %43 : f32 to vector<1x1xf32>
      %45 = arith.mulf %44, %39 : vector<1x1xf32>
      %46 = arith.addf %42, %45 : vector<1x1xf32>
      %47 = arith.negf %46 : vector<1x1xf32>
      %48 = math.exp %47 : vector<1x1xf32>
      %cst_33 = arith.constant 1.000000e+00 : f32
      %49 = vector.broadcast %cst_33 : f32 to vector<1x1xf32>
      %50 = arith.addf %49, %48 : vector<1x1xf32>
      %51 = arith.divf %49, %50 : vector<1x1xf32>
      %52 = vector.shape_cast %51 : vector<1x1xf32> to vector<1x1x1xf32>
      %c0_34 = arith.constant 0 : index
      %c0_35 = arith.constant 0 : index
      %c0_36 = arith.constant 0 : index
      %53 = vector.load %arg6[%c0_34, %c0_35, %c0_36] : memref<1x1x1xf32, #tpu.memory_space<vmem>>, vector<1x1x1xf32>
      tpu.vector_store %arg6[%c0_34, %c0_35, %c0_36], %52 {strides = array<i32>} : memref<1x1x1xf32, #tpu.memory_space<vmem>>, vector<1x1x1xf32>,
    } else {
    }
    return
  }
  func.func @transform_0(%arg0: i32, %arg1: i32) -> (i32, i32, i32) {
    %c0_i32 = arith.constant 0 : i32
    %c0_i32_0 = arith.constant 0 : i32
    return %arg0, %c0_i32, %arg1 : i32, i32, i32
  }
  func.func @transform_1(%arg0: i32, %arg1: i32) -> (i32, i32) {
    %c0_i32 = arith.constant 0 : i32
    %c0_i32_0 = arith.constant 0 : i32
    %c0_i32_1 = arith.constant 0 : i32
    return %c0_i32, %c0_i32_0 : i32, i32
  }
  func.func @transform_2(%arg0: i32, %arg1: i32) -> (i32, i32) {
    %c0_i32 = arith.constant 0 : i32
    %c0_i32_0 = arith.constant 0 : i32
    %c0_i32_1 = arith.constant 0 : i32
    return %c0_i32, %c0_i32_0 : i32, i32
  }
  func.func @transform_3(%arg0: i32, %arg1: i32) -> i32 {
    %c0_i32 = arith.constant 0 : i32
    %c0_i32_0 = arith.constant 0 : i32
    return %c0_i32 : i32
  }
  func.func @transform_4(%arg0: i32, %arg1: i32) -> (i32, i32, i32) {
    %c0_i32 = arith.constant 0 : i32
    %c0_i32_0 = arith.constant 0 : i32
    %c0_i32_1 = arith.constant 0 : i32
    return %arg0, %c0_i32, %c0_i32_0 : i32, i32, i32
  }
}

</mosaic_0001>

<llo_original>
// kernel: cbam_block.1
$region0: #{cbam_block.1}
  #allocation0 [shape = 'u32[]', space=smem, size = 0x4, offset = 0x4, fixed_abs, tag = 'smem constant byte address 0x4 - core index']
  #allocation1 [shape = 'u32[72,128]{1,0:T(1,128)}', space=vmem, size = 0x9000, scoped, tag = 'internal scratch']
  #allocation2 [shape = 'f32[1,32]{1,0:T(1,128)}', space=vmem, size = 0x200, scoped, tag = 'scratch operand']
  #allocation3 [shape = 'f32[1,32]{1,0:T(1,128)}', space=vmem, size = 0x200, scoped, tag = 'scratch operand']
  %s0 = inlined_call_operand.vmem [shape: f32[2,32,256], index: 0, kind: input, shape index: {}]
  %s1 = inlined_call_operand.vmem [shape: f32[32,128], index: 1, kind: input, shape index: {}]
  %s2 = inlined_call_operand.vmem [shape: f32[128,32], index: 2, kind: input, shape index: {}]
  %s3 = inlined_call_operand.vmem [shape: f32[2], index: 3, kind: input, shape index: {}]
  %s4 = inlined_call_operand.vmem [shape: f32[2,1,1], index: 4, kind: output, shape index: {}]
  %s5 = sld [smem:[#allocation0]]
  $region61: #{cbam_block.1} parent=0
    _
  %s7 = ssub.s32 1, %s5
  %s8 = scalar_select 0, %s7, %s5
  $region1: #{cbam_block.1} parent=0
    #allocation4 [shape = 'u8[512]{0}', space=smem, size = 0x200, scoped, tag = 'input window, operand 3, single buffered']
    #allocation5 [shape = 's32[2]{0}', space=sflag, size = 0x8, scoped, tag = 'scoped memory for cbam_block.1']
    %9 = vsyncpa [#allocation5], 0
    loop: start=0, step=1, limit=4
    $region2: #{cbam_block.1} parent=1 // loop_pre_header
      _
    $region3: #{cbam_block.1} parent=1 // loop_header
      %s11 = sphi 0, %s15
      %p12 = scmp.ge.s32.totalorder %s11, 4
      %s18 = sphi 0, %s30
      %s19 = sphi 0, %s26
      %s20 = sphi 0, %s18
      %s21 = sphi 0, %s19
      %s22 = sphi 0, %s20
      %s23 = sphi 0, %s21
      %s35 = sphi 0, %s37
      %s38 = sphi 0, %s35
      %s39 = sphi 0, %s38
      %s55 = sphi 0, %s39
      %s59 = sphi 0, %s59
      %s61 = sphi 0, %s59
      %s62 = sphi 0, %s61
      %s76 = sphi 0, %s62
      %s80 = sphi 0, %s80
      %s82 = sphi 0, %s80
      %s83 = sphi 0, %s82
      %s97 = sphi 0, %s83
      %s101 = sphi 0, %s101
      %s103 = sphi 0, %s101
      %s104 = sphi 0, %s103
      %s118 = sphi 0, %s104
      %s124 = sphi 0, %s126
      %s127 = sphi 0, %s124
      %s128 = sphi 0, %s127
      %s144 = sphi 0, %s128
    $region4: #{cbam_block.1} parent=1 // loop_header_branch
      %14 = sbr.rel (%p12) target = $region8
    $region5: #{cbam_block.1} parent=1 // loop_body
      %s16 = ssub.s32 %s11, 1
      %s17 = ssub.s32 %s11, 2
      %s24 = sadd.s32 1, %s19
      %p25 = scmp.ge.s32.totalorder %s24, 1
      %s26 = scalar_select %p25, 0, %s24
      %s27 = sadd.s32 1, %s18
      %s28 = scalar_select %p25, %s27, %s18
      %p29 = scmp.ge.s32.totalorder %s28, 2
      %s30 = scalar_select %p29, 0, %s28
      %s31 = ssub.s32 %s18, %s30
      %s32 = ssub.s32 %s19, %s26
      %s33 = sor.u32 %s31, %s32
      %p34 = scmp.eq.s32.totalorder %s33, 0
      %s36 = sadd.s32 %s35, 1
      %s37 = scalar_select %p34, %s35, %s36
      %p40 = pneg %p34
      %p41 = scmp.eq.s32.totalorder %s11, 1
      %p42 = por %p40, %p41
      %p43 = scmp.ne.s32.totalorder %s35, %s38
      %p44 = scmp.eq.s32.totalorder %s11, 0
      %p45 = por %p43, %p44
      %p46 = scmp.ne.s32.totalorder %s35, %s38
      %p47 = scmp.eq.s32.totalorder %s16, 1
      %p48 = por %p46, %p47
      %p49 = scmp.ne.s32.totalorder %s38, %s39
      %p50 = scmp.eq.s32.totalorder %s16, 0
      %p51 = por %p49, %p50
      %p52 = scmp.ne.s32.totalorder %s38, %s39
      %p53 = scmp.eq.s32.totalorder %s17, 1
      %p54 = por %p52, %p53
      %p56 = scmp.ne.s32.totalorder %s39, %s55
      %p57 = scmp.eq.s32.totalorder %s17, 0
      %p58 = por %p56, %p57
      %s60 = sadd.s32 %s59, 1
      %p63 = scmp.eq.s32.totalorder %s11, 1
      %p64 = scmp.ne.s32.totalorder %s59, %s61
      %p65 = scmp.eq.s32.totalorder %s11, 0
      %p66 = por %p64, %p65
      %p67 = scmp.ne.s32.totalorder %s59, %s61
      %p68 = scmp.eq.s32.totalorder %s16, 1
      %p69 = por %p67, %p68
      %p70 = scmp.ne.s32.totalorder %s61, %s62
      %p71 = scmp.eq.s32.totalorder %s16, 0
      %p72 = por %p70, %p71
      %p73 = scmp.ne.s32.totalorder %s61, %s62
      %p74 = scmp.eq.s32.totalorder %s17, 1
      %p75 = por %p73, %p74
      %p77 = scmp.ne.s32.totalorder %s62, %s76
      %p78 = scmp.eq.s32.totalorder %s17, 0
      %p79 = por %p77, %p78
      %s81 = sadd.s32 %s80, 1
      %p84 = scmp.eq.s32.totalorder %s11, 1
      %p85 = scmp.ne.s32.totalorder %s80, %s82
      %p86 = scmp.eq.s32.totalorder %s11, 0
      %p87 = por %p85, %p86
      %p88 = scmp.ne.s32.totalorder %s80, %s82
      %p89 = scmp.eq.s32.totalorder %s16, 1
      %p90 = por %p88, %p89
      %p91 = scmp.ne.s32.totalorder %s82, %s83
      %p92 = scmp.eq.s32.totalorder %s16, 0
      %p93 = por %p91, %p92
      %p94 = scmp.ne.s32.totalorder %s82, %s83
      %p95 = scmp.eq.s32.totalorder %s17, 1
      %p96 = por %p94, %p95
      %p98 = scmp.ne.s32.totalorder %s83, %s97
      %p99 = scmp.eq.s32.totalorder %s17, 0
      %p100 = por %p98, %p99
      %s102 = sadd.s32 %s101, 1
      %p105 = scmp.eq.s32.totalorder %s11, 1
      %p106 = scmp.ne.s32.totalorder %s101, %s103
      %p107 = scmp.eq.s32.totalorder %s11, 0
      %p108 = por %p106, %p107
      %p109 = scmp.ne.s32.totalorder %s101, %s103
      %p110 = scmp.eq.s32.totalorder %s16, 1
      %p111 = por %p109, %p110
      %p112 = scmp.ne.s32.totalorder %s103, %s104
      %p113 = scmp.eq.s32.totalorder %s16, 0
      %p114 = por %p112, %p113
      %p115 = scmp.ne.s32.totalorder %s103, %s104
      %p116 = scmp.eq.s32.totalorder %s17, 1
      %p117 = por %p115, %p116
      %p119 = scmp.ne.s32.totalorder %s104, %s118
      %p120 = scmp.eq.s32.totalorder %s17, 0
      %p121 = por %p119, %p120
      %s122 = ssub.s32 %s18, %s30
      %p123 = scmp.eq.s32.totalorder %s122, 0
      %s125 = sadd.s32 %s124, 1
      %s126 = scalar_select %p123, %s124, %s125
      %p129 = pneg %p123
      %p130 = scmp.eq.s32.totalorder %s11, 1
      %p131 = por %p129, %p130
      %p132 = scmp.ne.s32.totalorder %s124, %s127
      %p133 = scmp.eq.s32.totalorder %s11, 0
      %p134 = por %p132, %p133
      %p135 = scmp.ne.s32.totalorder %s124, %s127
      %p136 = scmp.eq.s32.totalorder %s16, 1
      %p137 = por %p135, %p136
      %p138 = scmp.ne.s32.totalorder %s127, %s128
      %p139 = scmp.eq.s32.totalorder %s16, 0
      %p140 = por %p138, %p139
      %p141 = scmp.ne.s32.totalorder %s127, %s128
      %p142 = scmp.eq.s32.totalorder %s17, 1
      %p143 = por %p141, %p142
      %p145 = scmp.ne.s32.totalorder %s128, %s144
      %p146 = scmp.eq.s32.totalorder %s17, 0
      %p147 = por %p145, %p146
      %p148 = scmp.le.s32.totalorder 1, %s11
      %p149 = scmp.lt.s32.totalorder %s11, 3
      %p150 = pnand %p148, %p149
      %p151 = pneg %p150
      // Predicated region
      $region9: #{cbam_block.1} parent=5 // pred_check
        _
      $region10: #{cbam_block.1} parent=5 // pred_check_branch
        %153 = sbr.rel (%p150) target = $region12
      $region11: #{cbam_block.1} parent=5 // pred_region
        %s154 = ssub.s32 %s11, 1
        // Predicated region
        $region13: #{cbam_block.1} parent=11 // pred_check
          %p155 = pneg %p72
        $region14: #{cbam_block.1} parent=11 // pred_check_branch
          %157 = sbr.rel (%p155) target = $region16
        $region15: #{cbam_block.1} parent=11 // pred_region
          _
        $region16: #{cbam_block.1} parent=11 // pred_fallthru
          _
        // Predicated region
        $region17: #{cbam_block.1} parent=11 // pred_check
          %p158 = pneg %p93
        $region18: #{cbam_block.1} parent=11 // pred_check_branch
          %160 = sbr.rel (%p158) target = $region20
        $region19: #{cbam_block.1} parent=11 // pred_region
          _
        $region20: #{cbam_block.1} parent=11 // pred_fallthru
          _
        // Predicated region
        $region21: #{cbam_block.1} parent=11 // pred_check
          %p161 = pneg %p114
        $region22: #{cbam_block.1} parent=11 // pred_check_branch
          %163 = sbr.rel (%p161) target = $region24
        $region23: #{cbam_block.1} parent=11 // pred_region
          %165 = vsyncadd [#allocation5], 0
          %s167 = sshll.u32 %s3, 4
          %s168 = int_to_ptr.vmem [resolvable:$true] %s167
          %170 = dma.vmem_to_smem %s168, 16, [#allocation4], [#allocation5]
        $region24: #{cbam_block.1} parent=11 // pred_fallthru
          _
      $region12: #{cbam_block.1} parent=5 // pred_fallthru
        _
      %p171 = scmp.lt.s32.totalorder %s11, 2
      // Predicated region
      $region25: #{cbam_block.1} parent=5 // pred_check
        %p172 = pneg %p171
      $region26: #{cbam_block.1} parent=5 // pred_check_branch
        %174 = sbr.rel (%p172) target = $region28
      $region27: #{cbam_block.1} parent=5 // pred_region
        // Predicated region
        $region29: #{cbam_block.1} parent=27 // pred_check
          %p175 = pneg %p45
        $region30: #{cbam_block.1} parent=27 // pred_check_branch
          %177 = sbr.rel (%p175) target = $region32
        $region31: #{cbam_block.1} parent=27 // pred_region
          %s178 = smul.u32 2, %s19
          %p179 = scmp.lt.s32.totalorder %s18, 1
          %s180 = scalar_select %p179, %s18, 1
          %p181 = scmp.lt.s32.totalorder %s178, 1
          %s182 = scalar_select %p181, %s178, 1
          %s183 = smul.addr %s180, 8
          %s184 = sadd.s32 %s182, %s183
          %s185 = smul.addr %s184, 8
          %s186 = scalar_lea.vmem %s0, %s185
          %s187 = smul.u32 2, %s19
        $region32: #{cbam_block.1} parent=27 // pred_fallthru
          _
      $region28: #{cbam_block.1} parent=5 // pred_fallthru
        _
      %p188 = scmp.le.s32.totalorder 1, %s11
      %p189 = scmp.lt.s32.totalorder %s11, 3
      %p190 = pnand %p188, %p189
      %p191 = pneg %p190
      // Predicated region
      $region33: #{cbam_block.1} parent=5 // pred_check
        _
      $region34: #{cbam_block.1} parent=5 // pred_check_branch
        %193 = sbr.rel (%p190) target = $region36
      $region35: #{cbam_block.1} parent=5 // pred_region
        %s194 = ssub.s32 %s11, 1
        // Predicated region
        $region37: #{cbam_block.1} parent=35 // pred_check
          %p195 = pneg %p114
        $region38: #{cbam_block.1} parent=35 // pred_check_branch
          %197 = sbr.rel (%p195) target = $region40
        $region39: #{cbam_block.1} parent=35 // pred_region
          %199 = dma.done [#allocation5], 16
        $region40: #{cbam_block.1} parent=35 // pred_fallthru
          _
        %200 = sfence
        %s201 = smul.u32 2, %s21
        %p202 = scmp.lt.s32.totalorder %s20, 1
        %s203 = scalar_select %p202, %s20, 1
        %p204 = scmp.lt.s32.totalorder %s201, 1
        %s205 = scalar_select %p204, %s201, 1
        %s206 = smul.addr %s203, 8
        %s207 = sadd.s32 %s205, %s206
        %s208 = smul.addr %s207, 8
        %s209 = scalar_lea.vmem %s0, %s208
        %p210 = pneg %p51
        %p211 = pneg %p48
        %p212 = pneg %p72
        %p213 = pneg %p69
        %p214 = pneg %p93
        %p215 = pneg %p90
        %p216 = pneg %p114
        %p217 = pneg %p111
        %p218 = pneg %p140
        %p219 = pneg %p137
        %p220 = scmp.lt.s32.totalorder %s20, 1
        %s221 = scalar_select %p220, %s20, 1
        %s222 = scalar_lea.vmem %s4, %s221
        %s223 = smul.u32 2, %s21
        %p224 = scmp.lt.s32.totalorder %s20, 1
        %s225 = scalar_select %p224, %s20, 1
        %p226 = scmp.lt.s32.totalorder %s223, 1
        %s227 = scalar_select %p226, %s223, 1
        %s228 = smul.addr %s225, 8
        %s229 = sadd.s32 %s227, %s228
        %s230 = smul.addr %s229, 8
        %s231 = scalar_lea.vmem %s0, %s230
        %s232 = smul.u32 2, %s21
        %p233 = scmp.lt.s32.totalorder %s20, 1
        %s234 = scalar_select %p233, %s20, 1
        %s235 = scalar_lea.vmem %s4, %s234
        %p236 = scmp.eq.s32.totalorder %s21, 0
        // Predicated region
        $region41: #{cbam_block.1} parent=35 // pred_check
          %p237 = pneg %p236
        $region42: #{cbam_block.1} parent=35 // pred_check_branch
          %239 = sbr.rel (%p237) target = $region44
        $region43: #{cbam_block.1} parent=35 // pred_region
          %vm240 = vcmask 253952
          %241 = vst.msk [vmem:[#allocation2] sm:$0x1] %vm240, 0.0
          %242 = vst.msk [vmem:[#allocation3] sm:$0x1] %vm240, -inf
        $region44: #{cbam_block.1} parent=35 // pred_fallthru
          _
        %v243 = vld [vmem:[%s231] sm:$0xff]
        %v244 = vld [vmem:[%s231 + $0x8] sm:$0xff]
        %v245 = vld [vmem:[%s231 + $0x10] sm:$0xff]
        %v246 = vld [vmem:[%s231 + $0x18] sm:$0xff]
        %v247 = vld [vmem:[%s231 + $0x20] sm:$0xff]
        %v248 = vld [vmem:[%s231 + $0x28] sm:$0xff]
        %v249 = vld [vmem:[%s231 + $0x30] sm:$0xff]
        %v250 = vld [vmem:[%s231 + $0x38] sm:$0xff]
        %v251 = vld [vmem:[#allocation2] sm:$0x1]
        %v252 = vadd.f32 %v243, %v244
        %253 = vadd.xlane.f32.xlu0 %v252
        %v254 = vpop.xlane.xlu0 %253
        %v255 = vadd.f32 %v245, %v246
        %256 = vadd.xlane.f32.xlu0 %v255
        %v257 = vpop.xlane.xlu0 %256
        %v258 = vadd.f32 %v247, %v248
        %259 = vadd.xlane.f32.xlu0 %v258
        %v260 = vpop.xlane.xlu0 %259
        %v261 = vadd.f32 %v249, %v250
        %262 = vadd.xlane.f32.xlu0 %v261
        %v263 = vpop.xlane.xlu0 %262
        %v268 = vperm.slane %v254, 0
        %v269 = vperm.slane %v254, 1
        %v270 = vperm.slane %v254, 2
        %v271 = vperm.slane %v254, 3
        %v272 = vperm.slane %v254, 4
        %v273 = vperm.slane %v254, 5
        %v274 = vperm.slane %v254, 6
        %v275 = vperm.slane %v254, 7
        %v276 = vperm.slane %v257, 0
        %v277 = vperm.slane %v257, 1
        %v278 = vperm.slane %v257, 2
        %v279 = vperm.slane %v257, 3
        %v280 = vperm.slane %v257, 4
        %v281 = vperm.slane %v257, 5
        %v282 = vperm.slane %v257, 6
        %v283 = vperm.slane %v257, 7
        %v284 = vperm.slane %v260, 0
        %v285 = vperm.slane %v260, 1
        %v286 = vperm.slane %v260, 2
        %v287 = vperm.slane %v260, 3
        %v288 = vperm.slane %v260, 4
        %v289 = vperm.slane %v260, 5
        %v290 = vperm.slane %v260, 6
        %v291 = vperm.slane %v260, 7
        %v292 = vperm.slane %v263, 0
        %v293 = vperm.slane %v263, 1
        %v294 = vperm.slane %v263, 2
        %v295 = vperm.slane %v263, 3
        %v296 = vperm.slane %v263, 4
        %v297 = vperm.slane %v263, 5
        %v298 = vperm.slane %v263, 6
        %v299 = vperm.slane %v263, 7
        %300 = vst [vmem:[#allocation1] ss:$9 sm:$0xff] %v268
        %s301 = scalar_lea.vmem [#allocation1], 1
        %302 = vst [vmem:[%s301] ss:$9 sm:$0xff] %v269
        %s303 = scalar_lea.vmem [#allocation1], 2
        %304 = vst [vmem:[%s303] ss:$9 sm:$0xff] %v270
        %s305 = scalar_lea.vmem [#allocation1], 3
        %306 = vst [vmem:[%s305] ss:$9 sm:$0xff] %v271
        %s307 = scalar_lea.vmem [#allocation1], 4
        %308 = vst [vmem:[%s307] ss:$9 sm:$0xff] %v272
        %s309 = scalar_lea.vmem [#allocation1], 5
        %310 = vst [vmem:[%s309] ss:$9 sm:$0xff] %v273
        %s311 = scalar_lea.vmem [#allocation1], 6
        %312 = vst [vmem:[%s311] ss:$9 sm:$0xff] %v274
        %s313 = scalar_lea.vmem [#allocation1], 7
        %314 = vst [vmem:[%s313] ss:$9 sm:$0xff] %v275
        %v315 = vld [vmem:[#allocation1] sm:$0xff]
        %316 = vst [vmem:[#allocation1] ss:$9 sm:$0xff] %v276
        %317 = vst [vmem:[%s301] ss:$9 sm:$0xff] %v277
        %318 = vst [vmem:[%s303] ss:$9 sm:$0xff] %v278
        %319 = vst [vmem:[%s305] ss:$9 sm:$0xff] %v279
        %320 = vst [vmem:[%s307] ss:$9 sm:$0xff] %v280
        %321 = vst [vmem:[%s309] ss:$9 sm:$0xff] %v281
        %322 = vst [vmem:[%s311] ss:$9 sm:$0xff] %v282
        %323 = vst [vmem:[%s313] ss:$9 sm:$0xff] %v283
        %v324 = vld [vmem:[#allocation1] sm:$0xff]
        %325 = vst [vmem:[#allocation1] ss:$9 sm:$0xff] %v284
        %326 = vst [vmem:[%s301] ss:$9 sm:$0xff] %v285
        %327 = vst [vmem:[%s303] ss:$9 sm:$0xff] %v286
        %328 = vst [vmem:[%s305] ss:$9 sm:$0xff] %v287
        %329 = vst [vmem:[%s307] ss:$9 sm:$0xff] %v288
        %330 = vst [vmem:[%s309] ss:$9 sm:$0xff] %v289
        %331 = vst [vmem:[%s311] ss:$9 sm:$0xff] %v290
        %332 = vst [vmem:[%s313] ss:$9 sm:$0xff] %v291
        %v333 = vld [vmem:[#allocation1] sm:$0xff]
        %334 = vst [vmem:[#allocation1] ss:$9 sm:$0xff] %v292
        %335 = vst [vmem:[%s301] ss:$9 sm:$0xff] %v293
        %336 = vst [vmem:[%s303] ss:$9 sm:$0xff] %v294
        %337 = vst [vmem:[%s305] ss:$9 sm:$0xff] %v295
        %338 = vst [vmem:[%s307] ss:$9 sm:$0xff] %v296
        %339 = vst [vmem:[%s309] ss:$9 sm:$0xff] %v297
        %340 = vst [vmem:[%s311] ss:$9 sm:$0xff] %v298
        %341 = vst [vmem:[%s313] ss:$9 sm:$0xff] %v299
        %v342 = vld [vmem:[#allocation1] sm:$0xff]
        %343 = vset.pattern.permute.xlu0 0
        %344 = vperm.xlu0 %343, %v315
        %v345 = vpop.permute.xlu0 %344
        %346 = vset.pattern.permute.xlu0 0
        %347 = vperm.xlu0 %346, %v324
        %v348 = vpop.permute.xlu0 %347
        %349 = vset.pattern.permute.xlu0 0
        %350 = vperm.xlu0 %349, %v333
        %v351 = vpop.permute.xlu0 %350
        %352 = vset.pattern.permute.xlu0 0
        %353 = vperm.xlu0 %352, %v342
        %v354 = vpop.permute.xlu0 %353
        %v355 = vlaneseq
        %v356 = vand.u32 %v355, 127
        %v357 = vperm.slane %v345, %v356
        %v358 = vadd.s32 %v356, 4294967288
        %v359 = vperm.slane %v348, %v358
        %vm360 = vcmask 130112
        %v361 = vsel %vm360, %v359, %v357
        %v362 = vadd.s32 %v356, 4294967280
        %v363 = vperm.slane %v351, %v362
        %vm364 = vcmask 195712
        %v365 = vsel %vm364, %v363, %v361
        %v366 = vadd.s32 %v356, 4294967272
        %v367 = vperm.slane %v354, %v366
        %vm368 = vcmask 261312
        %v369 = vsel %vm368, %v367, %v365
        %v371 = vadd.f32 %v251, %v369
        %vm372 = vcmask 253952
        %373 = vst.msk [vmem:[#allocation2] sm:$0x1] %vm372, %v371
        %v374 = vld [vmem:[#allocation3] sm:$0x1]
        %v375 = vmax.f32 %v243, %v244
        %376 = vmax.xlane.f32.xlu0 %v375
        %v377 = vpop.xlane.xlu0 %376
        %v378 = vmax.f32 %v245, %v246
        %379 = vmax.xlane.f32.xlu0 %v378
        %v380 = vpop.xlane.xlu0 %379
        %v381 = vmax.f32 %v247, %v248
        %382 = vmax.xlane.f32.xlu0 %v381
        %v383 = vpop.xlane.xlu0 %382
        %v384 = vmax.f32 %v249, %v250
        %385 = vmax.xlane.f32.xlu0 %v384
        %v386 = vpop.xlane.xlu0 %385
        %v391 = vperm.slane %v377, 0
        %v392 = vperm.slane %v377, 1
        %v393 = vperm.slane %v377, 2
        %v394 = vperm.slane %v377, 3
        %v395 = vperm.slane %v377, 4
        %v396 = vperm.slane %v377, 5
        %v397 = vperm.slane %v377, 6
        %v398 = vperm.slane %v377, 7
        %v399 = vperm.slane %v380, 0
        %v400 = vperm.slane %v380, 1
        %v401 = vperm.slane %v380, 2
        %v402 = vperm.slane %v380, 3
        %v403 = vperm.slane %v380, 4
        %v404 = vperm.slane %v380, 5
        %v405 = vperm.slane %v380, 6
        %v406 = vperm.slane %v380, 7
        %v407 = vperm.slane %v383, 0
        %v408 = vperm.slane %v383, 1
        %v409 = vperm.slane %v383, 2
        %v410 = vperm.slane %v383, 3
        %v411 = vperm.slane %v383, 4
        %v412 = vperm.slane %v383, 5
        %v413 = vperm.slane %v383, 6
        %v414 = vperm.slane %v383, 7
        %v415 = vperm.slane %v386, 0
        %v416 = vperm.slane %v386, 1
        %v417 = vperm.slane %v386, 2
        %v418 = vperm.slane %v386, 3
        %v419 = vperm.slane %v386, 4
        %v420 = vperm.slane %v386, 5
        %v421 = vperm.slane %v386, 6
        %v422 = vperm.slane %v386, 7
        %423 = vst [vmem:[#allocation1] ss:$9 sm:$0xff] %v391
        %s424 = scalar_lea.vmem [#allocation1], 1
        %425 = vst [vmem:[%s424] ss:$9 sm:$0xff] %v392
        %s426 = scalar_lea.vmem [#allocation1], 2
        %427 = vst [vmem:[%s426] ss:$9 sm:$0xff] %v393
        %s428 = scalar_lea.vmem [#allocation1], 3
        %429 = vst [vmem:[%s428] ss:$9 sm:$0xff] %v394
        %s430 = scalar_lea.vmem [#allocation1], 4
        %431 = vst [vmem:[%s430] ss:$9 sm:$0xff] %v395
        %s432 = scalar_lea.vmem [#allocation1], 5
        %433 = vst [vmem:[%s432] ss:$9 sm:$0xff] %v396
        %s434 = scalar_lea.vmem [#allocation1], 6
        %435 = vst [vmem:[%s434] ss:$9 sm:$0xff] %v397
        %s436 = scalar_lea.vmem [#allocation1], 7
        %437 = vst [vmem:[%s436] ss:$9 sm:$0xff] %v398
        %v438 = vld [vmem:[#allocation1] sm:$0xff]
        %439 = vst [vmem:[#allocation1] ss:$9 sm:$0xff] %v399
        %440 = vst [vmem:[%s424] ss:$9 sm:$0xff] %v400
        %441 = vst [vmem:[%s426] ss:$9 sm:$0xff] %v401
        %442 = vst [vmem:[%s428] ss:$9 sm:$0xff] %v402
        %443 = vst [vmem:[%s430] ss:$9 sm:$0xff] %v403
        %444 = vst [vmem:[%s432] ss:$9 sm:$0xff] %v404
        %445 = vst [vmem:[%s434] ss:$9 sm:$0xff] %v405
        %446 = vst [vmem:[%s436] ss:$9 sm:$0xff] %v406
        %v447 = vld [vmem:[#allocation1] sm:$0xff]
        %448 = vst [vmem:[#allocation1] ss:$9 sm:$0xff] %v407
        %449 = vst [vmem:[%s424] ss:$9 sm:$0xff] %v408
        %450 = vst [vmem:[%s426] ss:$9 sm:$0xff] %v409
        %451 = vst [vmem:[%s428] ss:$9 sm:$0xff] %v410
        %452 = vst [vmem:[%s430] ss:$9 sm:$0xff] %v411
        %453 = vst [vmem:[%s432] ss:$9 sm:$0xff] %v412
        %454 = vst [vmem:[%s434] ss:$9 sm:$0xff] %v413
        %455 = vst [vmem:[%s436] ss:$9 sm:$0xff] %v414
        %v456 = vld [vmem:[#allocation1] sm:$0xff]
        %457 = vst [vmem:[#allocation1] ss:$9 sm:$0xff] %v415
        %458 = vst [vmem:[%s424] ss:$9 sm:$0xff] %v416
        %459 = vst [vmem:[%s426] ss:$9 sm:$0xff] %v417
        %460 = vst [vmem:[%s428] ss:$9 sm:$0xff] %v418
        %461 = vst [vmem:[%s430] ss:$9 sm:$0xff] %v419
        %462 = vst [vmem:[%s432] ss:$9 sm:$0xff] %v420
        %463 = vst [vmem:[%s434] ss:$9 sm:$0xff] %v421
        %464 = vst [vmem:[%s436] ss:$9 sm:$0xff] %v422
        %v465 = vld [vmem:[#allocation1] sm:$0xff]
        %466 = vset.pattern.permute.xlu0 0
        %467 = vperm.xlu0 %466, %v438
        %v468 = vpop.permute.xlu0 %467
        %469 = vset.pattern.permute.xlu0 0
        %470 = vperm.xlu0 %469, %v447
        %v471 = vpop.permute.xlu0 %470
        %472 = vset.pattern.permute.xlu0 0
        %473 = vperm.xlu0 %472, %v456
        %v474 = vpop.permute.xlu0 %473
        %475 = vset.pattern.permute.xlu0 0
        %476 = vperm.xlu0 %475, %v465
        %v477 = vpop.permute.xlu0 %476
        %v478 = vperm.slane %v468, %v356
        %v479 = vperm.slane %v471, %v358
        %v480 = vsel %vm360, %v479, %v478
        %v481 = vperm.slane %v474, %v362
        %v482 = vsel %vm364, %v481, %v480
        %v483 = vperm.slane %v477, %v366
        %v484 = vsel %vm368, %v483, %v482
        %v486 = vmax.f32 %v374, %v484
        %487 = vst.msk [vmem:[#allocation3] sm:$0x1] %vm372, %v486
        // Predicated region
        $region45: #{cbam_block.1} parent=35 // pred_check
          %p488 = pneg %p236
        $region46: #{cbam_block.1} parent=35 // pred_check_branch
          %490 = sbr.rel (%p488) target = $region48
        $region47: #{cbam_block.1} parent=35 // pred_region
          %v491 = vld [vmem:[#allocation2] sm:$0x1]
          %v492 = vmul.f32 %v491, 0.00390625
          %v493 = vld [vmem:[#allocation3] sm:$0x1]
          %v494 = vld [vmem:[%s1] sm:$0xff]
          %v495 = vld [vmem:[%s1 + $0x8] sm:$0xff]
          %v496 = vld [vmem:[%s1 + $0x10] sm:$0xff]
          %v497 = vld [vmem:[%s1 + $0x18] sm:$0xff]
          %v498 = vld [vmem:[%s2] sm:$0xff]
          %v499 = vld [vmem:[%s2 + $0x8] sm:$0xff]
          %v500 = vld [vmem:[%s2 + $0x10] sm:$0xff]
          %v501 = vld [vmem:[%s2 + $0x18] sm:$0xff]
          %v502 = vld [vmem:[%s2 + $0x20] sm:$0xff]
          %v503 = vld [vmem:[%s2 + $0x28] sm:$0xff]
          %v504 = vld [vmem:[%s2 + $0x30] sm:$0xff]
          %v505 = vld [vmem:[%s2 + $0x38] sm:$0xff]
          %v506 = vld [vmem:[%s2 + $0x40] sm:$0xff]
          %v507 = vld [vmem:[%s2 + $0x48] sm:$0xff]
          %v508 = vld [vmem:[%s2 + $0x50] sm:$0xff]
          %v509 = vld [vmem:[%s2 + $0x58] sm:$0xff]
          %v510 = vld [vmem:[%s2 + $0x60] sm:$0xff]
          %v511 = vld [vmem:[%s2 + $0x68] sm:$0xff]
          %v512 = vld [vmem:[%s2 + $0x70] sm:$0xff]
          %v513 = vld [vmem:[%s2 + $0x78] sm:$0xff]
          %vm514 = vcmask 261120
          %v516 = vsel %vm514, %v492, 0
          %518 = vmatpush.msra.mxu0 0.0
          %519 = vmatpush.msra.mxu0 0.0
          %520 = vmatpush.msra.mxu0 0.0
          %521 = vmatpush.msra.mxu0 0.0
          %522 = vmatpush.msra.mxu0 0.0
          %523 = vmatpush.msra.mxu0 0.0
          %524 = vmatpush.msra.mxu0 0.0
          %525 = vmatpush.msra.mxu0 0.0
          %526 = vmatpush.msra.mxu0 0.0
          %527 = vmatpush.msra.mxu0 0.0
          %528 = vmatpush.msra.mxu0 0.0
          %529 = vmatpush.msra.mxu0 0.0
          %530 = vmatpush.msra.mxu0 %v497
          %531 = vmatpush.msra.mxu0 %v496
          %532 = vmatpush.msra.mxu0 %v495
          %533 = vmatpush.msra.mxu0 %v494
          %534 = vmatmul.f32.gmra.mxu0 %v516
          %v535 = vpop.f32.mrf.mxu0
          %v536 = vadd.f32 0.0, %v535
          %537 = vdwg.mxu0
          %v538 = vmax.f32 %v536, 0.0
          %v540 = vsel %vm514, %v493, 0
          %542 = vmatpush.msra.mxu0 0.0
          %543 = vmatpush.msra.mxu0 0.0
          %544 = vmatpush.msra.mxu0 0.0
          %545 = vmatpush.msra.mxu0 0.0
          %546 = vmatpush.msra.mxu0 0.0
          %547 = vmatpush.msra.mxu0 0.0
          %548 = vmatpush.msra.mxu0 0.0
          %549 = vmatpush.msra.mxu0 0.0
          %550 = vmatpush.msra.mxu0 0.0
          %551 = vmatpush.msra.mxu0 0.0
          %552 = vmatpush.msra.mxu0 0.0
          %553 = vmatpush.msra.mxu0 0.0
          %554 = vmatpush.msra.mxu0 %v497
          %555 = vmatpush.msra.mxu0 %v496
          %556 = vmatpush.msra.mxu0 %v495
          %557 = vmatpush.msra.mxu0 %v494
          %558 = vmatmul.f32.gmra.mxu0 %v540
          %v559 = vpop.f32.mrf.mxu0
          %v560 = vadd.f32 0.0, %v559
          %561 = vdwg.mxu0
          %v562 = vmax.f32 %v560, 0.0
          %v563 = vadd.f32 %v538, %v562
          %564 = vmatpush.msra.mxu0 %v513
          %565 = vmatpush.msra.mxu0 %v512
          %566 = vmatpush.msra.mxu0 %v511
          %567 = vmatpush.msra.mxu0 %v510
          %568 = vmatpush.msra.mxu0 %v509
          %569 = vmatpush.msra.mxu0 %v508
          %570 = vmatpush.msra.mxu0 %v507
          %571 = vmatpush.msra.mxu0 %v506
          %572 = vmatpush.msra.mxu0 %v505
          %573 = vmatpush.msra.mxu0 %v504
          %574 = vmatpush.msra.mxu0 %v503
          %575 = vmatpush.msra.mxu0 %v502
          %576 = vmatpush.msra.mxu0 %v501
          %577 = vmatpush.msra.mxu0 %v500
          %578 = vmatpush.msra.mxu0 %v499
          %579 = vmatpush.msra.mxu0 %v498
          %580 = vmatmul.f32.gmra.mxu0 %v563
          %v581 = vpop.f32.mrf.mxu0
          %v582 = vadd.f32 0.0, %v581
          %583 = vdwg.mxu0
          %v584 = vxor.u32 %v582, 2147483648
          %v585 = vmul.f32 %v584, 1.442695
          %v586 = vpow.pop %v585
          %v587 = vadd.f32 %v586, 1.0
          %v588 = vrcp.pop %v587
          %v589 = vmul.f32 %v587, %v588
          %v590 = vsub.f32 1.0, %v589
          %v591 = vmul.f32 %v588, %v590
          %v592 = vadd.f32 %v588, %v591
          %vm593 = vweird.f32 %v587
          %vm594 = vweird.f32 %v588
          %vm595 = vmor %vm593, %vm594
          %v596 = vsel %vm595, %v588, %v592
          %v597 = vand.u32 2147483647, %v587
          %vm598 = vcmp.eq.f32.partialorder %v597, 8.507059e+37
          %v599 = vand.u32 %v587, 2147483648
          %v600 = vor.u32 1.1754944e-38, %v599
          %v601 = vsel %vm598, %v600, %v596
          %v602 = vmul.f32 1.0, %v601
          %v603 = vsel %vm372, %v602, 0.0
          %604 = vadd.xlane.f32.xlu0 %v603
          %v605 = vpop.xlane.xlu0 %604
          %v606 = vrcp.pop 32.0
          %v607 = vmul.f32 32.0, %v606
          %v608 = vsub.f32 1.0, %v607
          %v609 = vmul.f32 %v606, %v608
          %v610 = vadd.f32 %v606, %v609
          %vm611 = vweird.f32 %v606
          %v612 = vsel %vm611, %v606, %v610
          %v613 = vmul.f32 %v605, %v612
          %v614 = vsel %vm372, %v602, -inf
          %615 = vmax.xlane.f32.xlu0 %v614
          %v616 = vpop.xlane.xlu0 %615
          %s617 = sld [smem:[#allocation4]]
          %v618 = vstv %s617
          %v619 = vmul.f32 %v618, %v613
          %s620 = sld [smem:[#allocation4 + $0x1]]
          %v621 = vstv %s620
          %v622 = vmul.f32 %v621, %v616
          %v623 = vadd.f32 %v619, %v622
          %v624 = vxor.u32 %v623, 2147483648
          %v625 = vmul.f32 %v624, 1.442695
          %v626 = vpow.pop %v625
          %v627 = vadd.f32 %v626, 1.0
          %v628 = vrcp.pop %v627
          %v629 = vmul.f32 %v627, %v628
          %v630 = vsub.f32 1.0, %v629
          %v631 = vmul.f32 %v628, %v630
          %v632 = vadd.f32 %v628, %v631
          %vm633 = vweird.f32 %v627
          %vm634 = vweird.f32 %v628
          %vm635 = vmor %vm633, %vm634
          %v636 = vsel %vm635, %v628, %v632
          %v637 = vand.u32 2147483647, %v627
          %vm638 = vcmp.eq.f32.partialorder %v637, 8.507059e+37
          %v639 = vand.u32 %v627, 2147483648
          %v640 = vor.u32 1.1754944e-38, %v639
          %v641 = vsel %vm638, %v640, %v636
          %v642 = vmul.f32 1.0, %v641
          %vm643 = vcmask 0
          %644 = vst.msk [vmem:[%s235] sm:$0x1] %vm643, %v642
        $region48: #{cbam_block.1} parent=35 // pred_fallthru
          _
        %p645 = scmp.lt.s32.totalorder %s20, 1
        %s646 = scalar_select %p645, %s20, 1
        %s647 = scalar_lea.vmem %s4, %s646
        // Predicated region
        $region49: #{cbam_block.1} parent=35 // pred_check
          %p648 = pneg %p137
        $region50: #{cbam_block.1} parent=35 // pred_check_branch
          %650 = sbr.rel (%p648) target = $region52
        $region51: #{cbam_block.1} parent=35 // pred_region
          _
        $region52: #{cbam_block.1} parent=35 // pred_fallthru
          _
      $region36: #{cbam_block.1} parent=5 // pred_fallthru
        _
      %p651 = scmp.le.s32.totalorder 2, %s11
      // Predicated region
      $region53: #{cbam_block.1} parent=5 // pred_check
        %p652 = pneg %p651
      $region54: #{cbam_block.1} parent=5 // pred_check_branch
        %654 = sbr.rel (%p652) target = $region56
      $region55: #{cbam_block.1} parent=5 // pred_region
        %s655 = ssub.s32 %s11, 2
        // Predicated region
        $region57: #{cbam_block.1} parent=55 // pred_check
          %p656 = pneg %p143
        $region58: #{cbam_block.1} parent=55 // pred_check_branch
          %658 = sbr.rel (%p656) target = $region60
        $region59: #{cbam_block.1} parent=55 // pred_region
          %p659 = scmp.lt.s32.totalorder %s22, 1
          %s660 = scalar_select %p659, %s22, 1
          %s661 = scalar_lea.vmem %s4, %s660
        $region60: #{cbam_block.1} parent=55 // pred_fallthru
          _
      $region56: #{cbam_block.1} parent=5 // pred_fallthru
        _
    $region6: #{cbam_block.1} parent=1 // loop_footer
      %s15 = sadd.s32 1, %s11
    $region7: #{cbam_block.1} parent=1 // loop_footer_branch
      %10 = sbr.rel target = $region3
    $region8: #{cbam_block.1} parent=1 // loop_exit
      _
    %662 = vsyncpa [#allocation5], 1
    %s663 = scalar_lea.sflag [#allocation5], 1
    %664 = vsyncpa %s663, 1

</llo_original>
